<compile_context>
chip_gen: v7x
topology: tpu7x:2x2x1
jax: 0.10.0
libtpu: 0.0.40
codegen_flags: <defaults>
</compile_context>

<pallas_src>
import functools
import math

import jax
import jax.numpy as jnp
from jax.experimental import pallas as pl
from jax.experimental.pallas import tpu as pltpu


def _scale_bias_kernel(x_ref, b_ref, o_ref, *, scale, use_scale):
    x = x_ref[...]
    if use_scale:
        x = x * scale
    # b_ref is either (tr, 1) (per-row/channel bias, broadcast along lanes) or
    # (1, tl) (lane-dense bias, broadcast along sublanes) -- plain VPU add.
    o_ref[...] = x + b_ref[...]


def _scale_kernel(x_ref, o_ref, *, scale):
    o_ref[...] = x_ref[...] * scale


def _hw_budgets():
    """Generation-aware (target_block_bytes, vmem_limit_bytes)."""
    try:
        vmem = int(pltpu.get_tpu_info().vmem_capacity_bytes)
    except Exception:
        vmem = 64 * 1024 * 1024            # conservative default (v7x-sized)
    if vmem <= 64 * 1024 * 1024:           # v7x: 64 MiB physical per TC
        return 4 * 1024 * 1024, 40 * 1024 * 1024
    return 8 * 1024 * 1024, 64 * 1024 * 1024   # v5e / v6e: 128 MiB physical


def _pick_tiles(rows, lanes, itemsize, block_bytes):
    """Dtype-aware, ~block_bytes, lane-dense block sizing."""
    min_sub = max(8, 32 // itemsize)       # 8 f32 / 16 bf16 / 32 int8
    # Lane tile: full extent while a minimal-sublane block stays within budget,
    # otherwise ALWAYS cap to a 128-multiple (ragged trailing block is masked).
    if lanes <= 128 or min_sub * lanes * itemsize <= block_bytes:
        tl = lanes
    else:
        max_tl = max(128, (block_bytes // (min_sub * itemsize)) // 128 * 128)
        tl = min(max_tl, max(128, (lanes // 128) * 128))
    # Row tile: multiple of min_sub, targeting ~block_bytes per block.
    tr = block_bytes // max(1, tl * itemsize)
    tr = max(min_sub, (tr // min_sub) * min_sub)
    if tr >= rows:
        tr = rows                          # full extent is always legal
    return tr, tl, min_sub


def trans_wscale_layer(x, scale, bias=None):
    """Pallas equivalent of Trans_WScaleLayer.forward(x).

    scale: static Python float (the module computes it once at __init__).
    bias : optional 1-D per-output-channel bias with >= x.shape[1] entries.
    """
    assert x.ndim >= 2, "Trans_WScaleLayer expects (N, C, ...) input"
    scale = float(scale)
    n, c = x.shape[0], x.shape[1]
    use_scale = scale != 0.0
    # TODO(synk): PyTorch's literal `bias.expand_as(x)` (with the
    # `bias.size(0) >= x.size(1)` guard) would broadcast along the trailing
    # axis; we implement the intended per-output-channel broadcast
    # (bias[None, :, None, None]).  Confirm if bit-exact parity is required.
    use_bias = bias is not None and bias.shape[0] >= c

    if not use_scale and not use_bias:
        return x            # identity forward: no kernel, no HBM round trip

    spatial = math.prod(x.shape[2:]) if x.ndim > 2 else 1
    itemsize = x.dtype.itemsize
    block_bytes, vmem_limit = _hw_budgets()

    # Layout: keep the channel axis addressable for the bias while presenting
    # a lane-dense slab to the load/store units.
    channel_on_rows = spatial >= 128
    if channel_on_rows:
        rows, lanes = n * c, spatial       # bias: per-row (tr, 1) table
    else:
        rows, lanes = n, c * spatial       # bias: lane-dense (1, tl) table
    x_flat = x.reshape(rows, lanes)        # metadata-only view change

    tr, tl, min_sub = _pick_tiles(rows, lanes, itemsize, block_bytes)
    grid_r, grid_l = pl.cdiv(rows, tr), pl.cdiv(lanes, tl)
    # v7x has two TensorCores: ensure mid/large tensors yield >= 2 blocks along
    # a "parallel" axis.  Cheap on v5e/v6e (one extra ~0.35 us grid step).
    if (grid_r * grid_l == 1 and rows >= 2 * min_sub
            and rows * lanes * itemsize >= (1 << 20)):
        half = -(-rows // 2)                        # ceil(rows / 2)
        new_tr = -(-half // min_sub) * min_sub      # round up to min_sub
        if new_tr < rows:
            tr = new_tr
            grid_r = pl.cdiv(rows, tr)

    x_spec = pl.BlockSpec((tr, tl), lambda i, j: (i, j))
    out_spec = pl.BlockSpec((tr, tl), lambda i, j: (i, j))
    # TODO(synk): on v7x, switch x_spec to pipeline_mode=pl.Buffered(3) only if
    # a profile shows exposed input DMA; default depth 2 otherwise.

    compiler_params = pltpu.CompilerParams(
        dimension_semantics=("parallel", "parallel"),
        vmem_limit_bytes=vmem_limit,
    )
    n_ops = int(use_scale) + int(use_bias)
    if use_bias:
        bias_bytes = (rows * grid_l if channel_on_rows else lanes * grid_r)
        bias_bytes *= itemsize
    else:
        bias_bytes = 0
    cost = pl.CostEstimate(
        flops=n_ops * rows * lanes,
        transcendentals=0,
        bytes_accessed=2 * rows * lanes * itemsize + bias_bytes,
    )

    if use_bias:
        b = bias[:c].astype(x.dtype)
        if channel_on_rows:
            # Per-row bias table: row r = n*C + c -> bias[c].  Only N*C
            # elements; a real model would build/cache this once at init.
            b_tab = jnp.broadcast_to(b[None, :], (n, c)).reshape(rows, 1)
            b_spec = pl.BlockSpec((tr, 1), lambda i, j: (i, 0))
        else:
            # Lane-dense pre-broadcast table, broadcast along sublanes in-kernel.
            b_tab = jnp.broadcast_to(b[:, None], (c, spatial)).reshape(1, lanes)
            b_spec = pl.BlockSpec((1, tl), lambda i, j: (0, j))
        kernel = functools.partial(_scale_bias_kernel, scale=scale,
                                   use_scale=use_scale)
        out_flat = pl.pallas_call(
            kernel,
            out_shape=jax.ShapeDtypeStruct((rows, lanes), x.dtype),
            grid=(grid_r, grid_l),
            in_specs=[x_spec, b_spec],
            out_specs=out_spec,
            input_output_aliases={0: 0},   # only saves a copy if x is donated
            compiler_params=compiler_params,
            cost_estimate=cost,
        )(x_flat, b_tab)
    else:
        kernel = functools.partial(_scale_kernel, scale=scale)
        out_flat = pl.pallas_call(
            kernel,
            out_shape=jax.ShapeDtypeStruct((rows, lanes), x.dtype),
            grid=(grid_r, grid_l),
            in_specs=[x_spec],
            out_specs=out_spec,
            input_output_aliases={0: 0},
            compiler_params=compiler_params,
            cost_estimate=cost,
        )(x_flat)

    return out_flat.reshape(x.shape)


if __name__ == "__main__":
    key = jax.random.PRNGKey(0)
    k_w, k_b, k_x, k_x2, k_x3 = jax.random.split(key, 5)

    # "incoming" = ConvTranspose2d(in=3, out=4, k=3): weight (3, 4, 3, 3), bias (4,)
    in_ch, out_ch, ksize = 3, 4, 3
    weight = jax.random.normal(k_w, (in_ch, out_ch, ksize, ksize), dtype=jnp.float32)
    bias = jax.random.normal(k_b, (out_ch,), dtype=jnp.float32)

    # Equalized-lr scale, exactly as the module's __init__ computes it.
    # TODO(synk): the __init__-time in-place weight renormalization is
    # parameter surgery, not part of the forward pass, so it stays outside.
    scale = float(jnp.sqrt(jnp.mean(weight ** 2)))

    # ---- main path: (N, C, H, W) with spatial >= 128 (channel-on-rows) ----
    x = jax.random.normal(k_x, (2, out_ch, 16, 16), dtype=jnp.float32)
    ref = scale * x + bias[None, :, None, None]
    out = jax.block_until_ready(trans_wscale_layer(x, scale, bias))
    assert out.shape == x.shape and out.dtype == x.dtype
    assert bool(jnp.allclose(out, ref, rtol=1e-6, atol=1e-6)), (
        float(jnp.max(jnp.abs(out - ref))))

    # ---- tiny non-128-multiple spatial: channel folded into the lane axis ----
    x_small = jax.random.normal(k_x2, (2, out_ch, 7, 7), dtype=jnp.float32)
    ref_small = scale * x_small + bias[None, :, None, None]
    out_small = jax.block_until_ready(trans_wscale_layer(x_small, scale, bias))
    assert bool(jnp.allclose(out_small, ref_small, rtol=1e-6, atol=1e-6))

    # ---- 2-D input (N, C): C stays on the lane axis ----
    x2d = jax.random.normal(k_x3, (4, 32), dtype=jnp.float32)
    bias2d = jax.random.normal(k_b, (32,), dtype=jnp.float32)
    ref2d = scale * x2d + bias2d[None, :]
    out2d = jax.block_until_ready(trans_wscale_layer(x2d, scale, bias2d))
    assert bool(jnp.allclose(out2d, ref2d, rtol=1e-6, atol=1e-6))

    # ---- scale-only path (bias absent) ----
    out_s = jax.block_until_ready(trans_wscale_layer(x, scale, None))
    assert bool(jnp.allclose(out_s, scale * x, rtol=1e-6, atol=1e-6))

    # ---- identity path (scale == 0, no bias): no kernel launched ----
    out_id = jax.block_until_ready(trans_wscale_layer(x, 0.0, None))
    assert bool(jnp.array_equal(out_id, x))

    print("KERNEL_OK")
</pallas_src>

<mosaic_0001>
module attributes {stable_mosaic.version = 11 : i64} {
  func.func @_scale_bias_kernel(%arg0: i32, %arg1: i32, %arg2: memref<8x256xf32, #tpu.memory_space<vmem>>, %arg3: memref<8x1xf32, #tpu.memory_space<vmem>>, %arg4: memref<8x256xf32, #tpu.memory_space<vmem>>) attributes {dimension_semantics = [#tpu.dimension_semantics<parallel>, #tpu.dimension_semantics<parallel>], iteration_bounds = array<i64: 1, 1>, scalar_prefetch = 0 : i64, scratch_operands = 0 : i64, tpu.core_type = #tpu.core_type<tc>, window_params = [{transform_indices = @transform_0, window_bounds = array<i64: 8, 256>}, {transform_indices = @transform_1, window_bounds = array<i64: 8, 1>}, {transform_indices = @transform_2, window_bounds = array<i64: 8, 256>}]} {
    %c0 = arith.constant 0 : index
    %c0_0 = arith.constant 0 : index
    %0 = vector.load %arg2[%c0, %c0_0] : memref<8x256xf32, #tpu.memory_space<vmem>>, vector<8x256xf32>
    %cst = arith.constant 1.1919558 : f32
    %1 = vector.broadcast %cst : f32 to vector<8x256xf32>
    %2 = arith.mulf %0, %1 : vector<8x256xf32>
    %c0_1 = arith.constant 0 : index
    %c0_2 = arith.constant 0 : index
    %3 = vector.load %arg3[%c0_1, %c0_2] : memref<8x1xf32, #tpu.memory_space<vmem>>, vector<8x1xf32>
    %4 = vector.broadcast %3 : vector<8x1xf32> to vector<8x256xf32>
    %5 = arith.addf %2, %4 : vector<8x256xf32>
    %c0_3 = arith.constant 0 : index
    %c0_4 = arith.constant 0 : index
    %6 = vector.load %arg4[%c0_3, %c0_4] : memref<8x256xf32, #tpu.memory_space<vmem>>, vector<8x256xf32>
    tpu.vector_store %arg4[%c0_3, %c0_4], %5 {strides = array<i32>} : memref<8x256xf32, #tpu.memory_space<vmem>>, vector<8x256xf32>,
    return
  }
  func.func @transform_0(%arg0: i32, %arg1: i32) -> (i32, i32) {
    %c0_i32 = arith.constant 0 : i32
    return %arg0, %arg1 : i32, i32
  }
  func.func @transform_1(%arg0: i32, %arg1: i32) -> (i32, i32) {
    %c0_i32 = arith.constant 0 : i32
    %c0_i32_0 = arith.constant 0 : i32
    return %arg0, %c0_i32 : i32, i32
  }
  func.func @transform_2(%arg0: i32, %arg1: i32) -> (i32, i32) {
    %c0_i32 = arith.constant 0 : i32
    return %arg0, %arg1 : i32, i32
  }
}

</mosaic_0001>

<llo_original>
// kernel: tpu_custom_call.1
$region0: #{tpu_custom_call.1}
  #allocation0 [shape = 'u32[]', space=smem, size = 0x4, offset = 0x4, fixed_abs, tag = 'smem constant byte address 0x4 - core index']
  #allocation1 [shape = 'u32[144,128]{1,0:T(1,128)}', space=vmem, size = 0x12000, scoped, tag = 'internal scratch']
  %s0 = inlined_call_operand.hbm [shape: f32[8,256], index: 0, kind: input, shape index: {}, may-alias: {0,2}]
  %s1 = inlined_call_operand.vmem [shape: f32[8,1], index: 1, kind: input, shape index: {}]
  %s2 = inlined_call_operand.hbm [shape: f32[8,256], index: 2, kind: output, shape index: {}, may-alias: {0,2}]
  %s3 = sld [smem:[#allocation0]]
  $region22: #{tpu_custom_call.1} parent=0
    _
  %s5 = ssub.s32 1, %s3
  %s6 = scalar_select 0, %s5, %s3
  $region1: #{tpu_custom_call.1} parent=0
    #allocation2 [shape = 'u8[8192]{0}', space=vmem, size = 0x2000, scoped, tag = 'input window, operand 0, single buffered']
    #allocation3 [shape = 's32[1]{0}', space=sflag, size = 0x4, scoped, tag = 'scoped memory for tpu_custom_call.1']
    #allocation4 [shape = 's32[1]{0}', space=sflag, size = 0x4, scoped, tag = 'scoped memory for tpu_custom_call.1']
    #allocation5 [shape = 'u8[8192]{0}', space=vmem, size = 0x2000, scoped, tag = 'output window, operand 0, single buffered']
    %7 = vsyncpa [#allocation3], 0
    %8 = vsyncpa [#allocation4], 0
    // Predicated region
    $region2: #{tpu_custom_call.1} parent=1 // pred_check
      _
    $region3: #{tpu_custom_call.1} parent=1 // pred_check_branch
      %10 = sbr.rel (0) target = $region5
    $region4: #{tpu_custom_call.1} parent=1 // pred_region
      %s12 = ssub.s32 256, 256
      %13 = vsyncadd [#allocation3], %s12
      %s15 = sshll.u32 [#allocation2], 4
      %s16 = int_to_ptr.vmem [resolvable:$true] %s15
      %18 = dma.hbm_to_vmem [thread:$0]  %s0, 256, %s16, [#allocation3]
    $region5: #{tpu_custom_call.1} parent=1 // pred_fallthru
      _
    // Predicated region
    $region6: #{tpu_custom_call.1} parent=1 // pred_check
      _
    $region7: #{tpu_custom_call.1} parent=1 // pred_check_branch
      %20 = sbr.rel (0) target = $region9
    $region8: #{tpu_custom_call.1} parent=1 // pred_region
      _
    $region9: #{tpu_custom_call.1} parent=1 // pred_fallthru
      _
    // Predicated region
    $region10: #{tpu_custom_call.1} parent=1 // pred_check
      _
    $region11: #{tpu_custom_call.1} parent=1 // pred_check_branch
      %22 = sbr.rel (0) target = $region13
    $region12: #{tpu_custom_call.1} parent=1 // pred_region
      %23 = dma.done [#allocation3], 256
    $region13: #{tpu_custom_call.1} parent=1 // pred_fallthru
      _
    %v24 = vld [vmem:[#allocation2] sm:$0xff]
    %v25 = vld [vmem:[#allocation2 + $0x8] sm:$0xff]
    %v26 = vmul.f32 %v24, 1.1919558
    %v27 = vmul.f32 %v25, 1.1919558
    %v28 = vld [vmem:[%s1] sm:$0xff]
    %30 = vset.pattern.permute.xlu0 0
    %31 = vperm.xlu0 %30, %v28
    %v32 = vpop.permute.xlu0 %31
    %v34 = vadd.f32 %v26, %v32
    %v35 = vadd.f32 %v27, %v32
    %36 = vst [vmem:[#allocation5] sm:$0xff] %v34
    %37 = vst [vmem:[#allocation5 + $0x8] sm:$0xff] %v35
    // Predicated region
    $region14: #{tpu_custom_call.1} parent=1 // pred_check
      _
    $region15: #{tpu_custom_call.1} parent=1 // pred_check_branch
      %39 = sbr.rel (0) target = $region17
    $region16: #{tpu_custom_call.1} parent=1 // pred_region
      %s41 = ssub.s32 256, 256
      %42 = vsyncadd [#allocation4], %s41
      %s44 = sshll.u32 [#allocation5], 4
      %s45 = int_to_ptr.vmem [resolvable:$true] %s44
      %47 = dma.vmem_to_hbm [thread:$0]  %s45, 256, %s2, [#allocation4]
    $region17: #{tpu_custom_call.1} parent=1 // pred_fallthru
      _
    // Predicated region
    $region18: #{tpu_custom_call.1} parent=1 // pred_check
      _
    $region19: #{tpu_custom_call.1} parent=1 // pred_check_branch
      %49 = sbr.rel (0) target = $region21
    $region20: #{tpu_custom_call.1} parent=1 // pred_region
      %50 = dma.done [#allocation4], 256
    $region21: #{tpu_custom_call.1} parent=1 // pred_fallthru
      _
    %51 = vsyncpa [#allocation3], 1
    %52 = vsyncpa [#allocation4], 1

</llo_original>
